<compile_context>
chip_gen: v7x
topology: tpu7x:2x2x1
jax: 0.10.0
libtpu: 0.0.40
codegen_flags: <defaults>
</compile_context>

<pallas_src>
import functools

import jax
import jax.numpy as jnp
import numpy as np
from jax.experimental import pallas as pl
from jax.experimental.pallas import tpu as pltpu

LANES = 128
SUBLANES = 8
CHUNK_ROWS = 512          # 512x128 f32 = 256 KiB per elementwise temporary
EPS = 0.001


@functools.lru_cache(maxsize=1)
def _device_tuning():
    """Returns (num_tensorcores_to_use, target_block_rows) for the local TPU."""
    try:
        kind = jax.devices()[0].device_kind.lower()
    except Exception:
        kind = ""
    if "v7" in kind:   # 2 TensorCores/chip, ~3.2 TB/s: big blocks + core split
        return 2, 2048
    if "v6" in kind:   # single TC, 32 MiB default scoped VMEM
        return 1, 2048
    return 1, 1024     # v5e and older: 16 MiB default scoped VMEM


def _make_dp_loss_kernel(loss_type, use_mask, has_c, block_rows, nb, bpc,
                         need_guard):
    eps2 = EPS * EPS
    n_terms = 3 if has_c else 2
    n_chunks = block_rows // CHUNK_ROWS if block_rows % CHUNK_ROWS == 0 else 1
    chunk_rows = block_rows // n_chunks   # always a multiple of 8

    def term(p, g, m):
        d = p - g
        if loss_type == 'l2':
            md = d if m is None else m * d      # abs redundant under squaring
            return md * md
        a = jnp.abs(d) if m is None else m * jnp.abs(d)
        if loss_type == 'l1':
            return a
        return jnp.sqrt(a * a + eps2)           # charbonnier

    def fold(x):
        # (chunk_rows, 128) -> (8, 128): layout-preserving reshape then a
        # leading-axis sum (plain vreg adds on the VPU, no cross-lane XLU).
        return jnp.sum(x.reshape(chunk_rows // SUBLANES, SUBLANES, LANES),
                       axis=0)

    def kernel(*refs):
        idx = 0
        mask_ref = None
        if use_mask:
            mask_ref = refs[idx]
            idx += 1
        pg_refs = refs[idx:idx + 2 * n_terms]
        idx += 2 * n_terms
        out_refs = refs[idx:idx + n_terms]
        idx += n_terms
        sm_ref = refs[idx] if use_mask else None

        # Zero the per-core resident accumulators at the start of each core's
        # row-block range.
        @pl.when(pl.program_id(1) == 0)
        def _init():
            for r in out_refs:
                r[...] = jnp.zeros_like(r)
            if use_mask:
                sm_ref[...] = jnp.zeros_like(sm_ref)

        def _accumulate():
            accs = [jnp.zeros((SUBLANES, LANES), jnp.float32)
                    for _ in range(n_terms)]
            m_acc = jnp.zeros((SUBLANES, LANES), jnp.float32) if use_mask else None
            for c in range(n_chunks):            # static unroll, small temps
                rs = slice(c * chunk_rows, (c + 1) * chunk_rows)
                m = mask_ref[rs, :].astype(jnp.float32) if use_mask else None
                for t in range(n_terms):
                    p = pg_refs[2 * t][rs, :].astype(jnp.float32)
                    g = pg_refs[2 * t + 1][rs, :].astype(jnp.float32)
                    accs[t] = accs[t] + fold(term(p, g, m))
                if use_mask:
                    m_acc = m_acc + fold(m)
            for t in range(n_terms):
                out_refs[t][0] = out_refs[t][0] + accs[t]
            if use_mask:
                sm_ref[0] = sm_ref[0] + m_acc

        if need_guard:
            # The last core may have one redundant (clamped) grid step when the
            # block count is not a multiple of the core count: skip it.
            blk = pl.program_id(0) * bpc + pl.program_id(1)
            pl.when(blk < nb)(_accumulate)
        else:
            _accumulate()

    return kernel


def _jax_partial_sums(loss_type, m, pairs):
    """Plain-JAX per-term sums (ragged row tail / tiny inputs)."""
    sums = []
    for p, g in pairs:
        d = jnp.abs(p.astype(jnp.float32) - g.astype(jnp.float32))
        if m is not None:
            d = m * d
        if loss_type == 'charbonnier':
            sums.append(jnp.sum(jnp.sqrt(d * d + EPS * EPS)))
        elif loss_type == 'l1':
            sums.append(jnp.sum(d))
        else:  # l2
            sums.append(jnp.sum(d * d))
    sm = jnp.sum(m) if m is not None else None
    return sums, sm


@functools.partial(jax.jit, static_argnames=('loss_type', 'use_mask', 'has_c',
                                              'mask_count'))
def _dp_loss_impl(pred_l, pred_r, gt_l, gt_r, in_mask, pred_c, gt_c,
                  loss_type, use_mask, has_c, mask_count):
    total = int(np.prod(pred_l.shape))
    n_terms = 3 if has_c else 2
    pairs_full = [(pred_l, gt_l), (pred_r, gt_r)] + \
        ([(pred_c, gt_c)] if has_c else [])

    # ---- tiny inputs: not worth a kernel launch ------------------------------
    if -(-total // LANES) < SUBLANES:
        m = in_mask.astype(jnp.float32) if use_mask else None
        sums, sm = _jax_partial_sums(loss_type, m, pairs_full)
        sm = sm if use_mask else jnp.float32(mask_count)
        loss = sums[0] / sm + sums[1] / sm
        if has_c:
            loss = loss + sums[2] / sm
        return loss

    num_cores, target_rows = _device_tuning()

    # ---- lane-dense (rows, 128) views (free reshape; pad only if unaligned) --
    pad_elems = (-total) % LANES
    rows = (total + pad_elems) // LANES

    def as2d(x):
        flat = x.reshape(-1)
        if pad_elems:
            flat = jnp.pad(flat, (0, pad_elems))
        return flat.reshape(rows, LANES)

    mask2d = as2d(in_mask) if use_mask else None
    pg2d = [(as2d(p), as2d(g)) for p, g in pairs_full]

    # ---- block layout: kernel covers the largest block-aligned prefix --------
    block_rows = min(target_rows, (rows // SUBLANES) * SUBLANES)
    nb = rows // block_rows                  # full blocks handled by the kernel
    kernel_rows = nb * block_rows
    tail_rows = rows - kernel_rows           # ragged remainder -> plain JAX

    if nb < 2:
        num_cores = 1
    bpc = -(-nb // num_cores)                # row-blocks per core
    need_guard = (num_cores * bpc != nb)

    kernel = _make_dp_loss_kernel(loss_type, use_mask, has_c,
                                  block_rows, nb, bpc, need_guard)

    inputs = ([mask2d] if use_mask else []) + [a for pg in pg2d for a in pg]
    n_out = n_terms + int(use_mask)

    in_spec = pl.BlockSpec(
        (block_rows, LANES),
        lambda c, i: (jnp.minimum(c * bpc + i, nb - 1), 0))
    out_spec = pl.BlockSpec((1, SUBLANES, LANES), lambda c, i: (c, 0, 0))
    out_shape = jax.ShapeDtypeStruct((num_cores, SUBLANES, LANES), jnp.float32)

    if num_cores > 1:   # v7x: guarantee the cross-TensorCore split
        dims = (getattr(pltpu, "CORE_PARALLEL", pltpu.PARALLEL), pltpu.ARBITRARY)
    else:
        dims = ("arbitrary", "arbitrary")

    proc_elems = num_cores * bpc * block_rows * LANES
    cost = pl.CostEstimate(
        flops=(5 * n_terms + int(use_mask)) * proc_elems,
        transcendentals=(n_terms * proc_elems
                         if loss_type == 'charbonnier' else 0),
        bytes_accessed=int(sum(int(np.prod(a.shape)) * a.dtype.itemsize
                               for a in inputs)
                           + n_out * num_cores * SUBLANES * LANES * 4))

    outs = pl.pallas_call(
        kernel,
        out_shape=tuple([out_shape] * n_out),
        grid_spec=pltpu.PrefetchScalarGridSpec(
            num_scalar_prefetch=0,
            grid=(num_cores, bpc),
            in_specs=[in_spec] * len(inputs),
            out_specs=tuple([out_spec] * n_out)),
        compiler_params=pltpu.CompilerParams(dimension_semantics=dims),
        cost_estimate=cost,
    )(*inputs)

    term_sums = [jnp.sum(outs[t]) for t in range(n_terms)]
    sm = jnp.sum(outs[n_terms]) if use_mask else None

    # ---- ragged row tail (< block_rows rows) in plain JAX --------------------
    if tail_rows:
        tm = mask2d[kernel_rows:, :].astype(jnp.float32) if use_mask else None
        tail_pairs = [(p[kernel_rows:, :], g[kernel_rows:, :]) for p, g in pg2d]
        tsums, tsm = _jax_partial_sums(loss_type, tm, tail_pairs)
        term_sums = [s + t for s, t in zip(term_sums, tsums)]
        if use_mask:
            sm = sm + tsm

    if not use_mask:
        sm = jnp.float32(mask_count)

    # Padded zeros contribute exactly eps each to a charbonnier term (and
    # nothing to l1/l2 or to sum(mask)); remove the statically-known over-count.
    if loss_type == 'charbonnier' and pad_elems:
        term_sums = [s - jnp.float32(pad_elems * EPS) for s in term_sums]

    loss = term_sums[0] / sm + term_sums[1] / sm
    if has_c:
        loss = loss + term_sums[2] / sm
    return loss


def dp_loss(pred_l, pred_r, gt_l, gt_r, in_mask, pred_c=None, gt_c=None,
            loss_type='charbonnier', use_mask=True):
    """Pallas equivalent of DPLoss.forward."""
    if loss_type not in ('charbonnier', 'l1', 'l2'):
        raise NotImplementedError(
            'The specified loss type {} is not implemented'.format(loss_type))
    has_c = (pred_c is not None) and (gt_c is not None)
    if use_mask and in_mask.shape != pred_l.shape:
        # TODO(synk): torch broadcasting of a smaller mask is not emulated.
        raise ValueError('in_mask must have the same shape as the predictions')
    mask_count = int(np.prod(in_mask.shape)) if in_mask is not None \
        else int(np.prod(pred_l.shape))
    return _dp_loss_impl(
        pred_l, pred_r, gt_l, gt_r,
        in_mask if use_mask else None,
        pred_c if has_c else None,
        gt_c if has_c else None,
        loss_type, use_mask, has_c, mask_count)


# ----------------------------- reference & tests -----------------------------

def _ref_dp_loss(pred_l, pred_r, gt_l, gt_r, in_mask, pred_c=None, gt_c=None,
                 loss_type='charbonnier', use_mask=True):
    eps = 0.001
    mask = in_mask if use_mask else jnp.ones_like(in_mask)
    diff_l = mask * jnp.abs(pred_l - gt_l)
    diff_r = mask * jnp.abs(pred_r - gt_r)
    sm = jnp.sum(mask)
    has_c = pred_c is not None and gt_c is not None
    diff_c = mask * jnp.abs(pred_c - gt_c) if has_c else None
    if loss_type == 'charbonnier':
        loss_l = jnp.sum(jnp.sqrt(diff_l * diff_l + eps * eps)) / sm
        loss_r = jnp.sum(jnp.sqrt(diff_r * diff_r + eps * eps)) / sm
        loss_c = jnp.sum(jnp.sqrt(diff_c * diff_c + eps * eps)) / sm if has_c else 0.0
    elif loss_type == 'l1':
        loss_l, loss_r = jnp.sum(diff_l) / sm, jnp.sum(diff_r) / sm
        loss_c = jnp.sum(diff_c) / sm if has_c else 0.0
    else:  # l2
        loss_l, loss_r = jnp.sum(diff_l ** 2) / sm, jnp.sum(diff_r ** 2) / sm
        loss_c = jnp.sum(diff_c ** 2) / sm if has_c else 0.0
    return loss_l + loss_r + loss_c


def _check(shape, loss_type, use_mask, with_c, seed):
    keys = jax.random.split(jax.random.PRNGKey(seed), 8)
    pred_l = jax.random.normal(keys[0], shape, jnp.float32)
    pred_r = jax.random.normal(keys[1], shape, jnp.float32)
    gt_l = jax.random.normal(keys[2], shape, jnp.float32)
    gt_r = jax.random.normal(keys[3], shape, jnp.float32)
    pred_c = jax.random.normal(keys[4], shape, jnp.float32)
    gt_c = jax.random.normal(keys[5], shape, jnp.float32)
    in_mask = (jax.random.uniform(keys[6], shape) > 0.3).astype(jnp.float32)
    pc = pred_c if with_c else None
    gc = gt_c if with_c else None
    out = dp_loss(pred_l, pred_r, gt_l, gt_r, in_mask, pc, gc,
                  loss_type=loss_type, use_mask=use_mask)
    jax.block_until_ready(out)
    ref = _ref_dp_loss(pred_l, pred_r, gt_l, gt_r, in_mask, pc, gc,
                       loss_type=loss_type, use_mask=use_mask)
    np.testing.assert_allclose(np.asarray(out), np.asarray(ref),
                               rtol=1e-4, atol=1e-5)


if __name__ == "__main__":
    # primary small shape from the module (NCHW)
    base = (2, 4, 16, 16)
    _check(base, 'charbonnier', use_mask=True, with_c=True, seed=0)
    _check(base, 'charbonnier', use_mask=True, with_c=False, seed=0)
    _check(base, 'l1', use_mask=True, with_c=True, seed=0)
    _check(base, 'l2', use_mask=False, with_c=True, seed=0)
    # odd-sized shape: exercises the lane-unaligned pad + charbonnier correction
    _check((2, 3, 17, 19), 'charbonnier', use_mask=True, with_c=True, seed=1)
    # larger aligned shape: multi-block accumulation (zero-copy path)
    _check((2, 4, 256, 256), 'charbonnier', use_mask=True, with_c=True, seed=2)
    # non-block-multiple row count: exercises the plain-JAX ragged row tail
    _check((3, 4, 200, 256), 'charbonnier', use_mask=True, with_c=True, seed=3)
    # tiny input: plain-JAX fallback (no kernel launch)
    _check((1, 1, 4, 8), 'charbonnier', use_mask=True, with_c=True, seed=4)
    print("KERNEL_OK")
</pallas_src>

<mosaic_0001>
module attributes {stable_mosaic.version = 11 : i64} {
  func.func @kernel(%arg0: i32, %arg1: i32, %arg2: memref<16x128xf32, #tpu.memory_space<vmem>>, %arg3: memref<16x128xf32, #tpu.memory_space<vmem>>, %arg4: memref<16x128xf32, #tpu.memory_space<vmem>>, %arg5: memref<16x128xf32, #tpu.memory_space<vmem>>, %arg6: memref<16x128xf32, #tpu.memory_space<vmem>>, %arg7: memref<16x128xf32, #tpu.memory_space<vmem>>, %arg8: memref<16x128xf32, #tpu.memory_space<vmem>>, %arg9: memref<1x8x128xf32, #tpu.memory_space<vmem>>, %arg10: memref<1x8x128xf32, #tpu.memory_space<vmem>>, %arg11: memref<1x8x128xf32, #tpu.memory_space<vmem>>, %arg12: memref<1x8x128xf32, #tpu.memory_space<vmem>>) attributes {dimension_semantics = [#tpu.dimension_semantics<arbitrary>, #tpu.dimension_semantics<arbitrary>], iteration_bounds = array<i64: 1, 1>, scalar_prefetch = 0 : i64, scratch_operands = 0 : i64, tpu.core_type = #tpu.core_type<tc>, window_params = [{transform_indices = @transform_0, window_bounds = array<i64: 16, 128>}, {transform_indices = @transform_1, window_bounds = array<i64: 16, 128>}, {transform_indices = @transform_2, window_bounds = array<i64: 16, 128>}, {transform_indices = @transform_3, window_bounds = array<i64: 16, 128>}, {transform_indices = @transform_4, window_bounds = array<i64: 16, 128>}, {transform_indices = @transform_5, window_bounds = array<i64: 16, 128>}, {transform_indices = @transform_6, window_bounds = array<i64: 16, 128>}, {transform_indices = @transform_7, window_bounds = array<i64: 1, 8, 128>}, {transform_indices = @transform_8, window_bounds = array<i64: 1, 8, 128>}, {transform_indices = @transform_9, window_bounds = array<i64: 1, 8, 128>}, {transform_indices = @transform_10, window_bounds = array<i64: 1, 8, 128>}]} {
    %c0_i32 = arith.constant 0 : i32
    %0 = arith.cmpi eq, %arg1, %c0_i32 : i32
    %1 = arith.extui %0 : i1 to i32
    %c0_i32_0 = arith.constant 0 : i32
    %2 = arith.cmpi ne, %1, %c0_i32_0 : i32
    scf.if %2 {
      %cst_48 = arith.constant 0.000000e+00 : f32
      %71 = vector.broadcast %cst_48 : f32 to vector<1x8x128xf32>
      %c0_49 = arith.constant 0 : index
      %c0_50 = arith.constant 0 : index
      %c0_51 = arith.constant 0 : index
      %72 = vector.load %arg9[%c0_49, %c0_50, %c0_51] : memref<1x8x128xf32, #tpu.memory_space<vmem>>, vector<1x8x128xf32>
      tpu.vector_store %arg9[%c0_49, %c0_50, %c0_51], %71 {strides = array<i32>} : memref<1x8x128xf32, #tpu.memory_space<vmem>>, vector<1x8x128xf32>,
      %cst_52 = arith.constant 0.000000e+00 : f32
      %73 = vector.broadcast %cst_52 : f32 to vector<1x8x128xf32>
      %c0_53 = arith.constant 0 : index
      %c0_54 = arith.constant 0 : index
      %c0_55 = arith.constant 0 : index
      %74 = vector.load %arg10[%c0_53, %c0_54, %c0_55] : memref<1x8x128xf32, #tpu.memory_space<vmem>>, vector<1x8x128xf32>
      tpu.vector_store %arg10[%c0_53, %c0_54, %c0_55], %73 {strides = array<i32>} : memref<1x8x128xf32, #tpu.memory_space<vmem>>, vector<1x8x128xf32>,
      %cst_56 = arith.constant 0.000000e+00 : f32
      %75 = vector.broadcast %cst_56 : f32 to vector<1x8x128xf32>
      %c0_57 = arith.constant 0 : index
      %c0_58 = arith.constant 0 : index
      %c0_59 = arith.constant 0 : index
      %76 = vector.load %arg11[%c0_57, %c0_58, %c0_59] : memref<1x8x128xf32, #tpu.memory_space<vmem>>, vector<1x8x128xf32>
      tpu.vector_store %arg11[%c0_57, %c0_58, %c0_59], %75 {strides = array<i32>} : memref<1x8x128xf32, #tpu.memory_space<vmem>>, vector<1x8x128xf32>,
      %cst_60 = arith.constant 0.000000e+00 : f32
      %77 = vector.broadcast %cst_60 : f32 to vector<1x8x128xf32>
      %c0_61 = arith.constant 0 : index
      %c0_62 = arith.constant 0 : index
      %c0_63 = arith.constant 0 : index
      %78 = vector.load %arg12[%c0_61, %c0_62, %c0_63] : memref<1x8x128xf32, #tpu.memory_space<vmem>>, vector<1x8x128xf32>
      tpu.vector_store %arg12[%c0_61, %c0_62, %c0_63], %77 {strides = array<i32>} : memref<1x8x128xf32, #tpu.memory_space<vmem>>, vector<1x8x128xf32>,
    } else {
    }
    %cst = arith.constant 0.000000e+00 : f32
    %3 = vector.broadcast %cst : f32 to vector<8x128xf32>
    %cst_1 = arith.constant 0.000000e+00 : f32
    %4 = vector.broadcast %cst_1 : f32 to vector<8x128xf32>
    %cst_2 = arith.constant 0.000000e+00 : f32
    %5 = vector.broadcast %cst_2 : f32 to vector<8x128xf32>
    %cst_3 = arith.constant 0.000000e+00 : f32
    %6 = vector.broadcast %cst_3 : f32 to vector<8x128xf32>
    %c0 = arith.constant 0 : index
    %c0_4 = arith.constant 0 : index
    %7 = vector.load %arg2[%c0, %c0_4] : memref<16x128xf32, #tpu.memory_space<vmem>>, vector<16x128xf32>
    %c0_5 = arith.constant 0 : index
    %c0_6 = arith.constant 0 : index
    %8 = vector.load %arg3[%c0_5, %c0_6] : memref<16x128xf32, #tpu.memory_space<vmem>>, vector<16x128xf32>
    %c0_7 = arith.constant 0 : index
    %c0_8 = arith.constant 0 : index
    %9 = vector.load %arg4[%c0_7, %c0_8] : memref<16x128xf32, #tpu.memory_space<vmem>>, vector<16x128xf32>
    %10 = arith.subf %8, %9 : vector<16x128xf32>
    %11 = math.absf %10 : vector<16x128xf32>
    %12 = arith.mulf %7, %11 : vector<16x128xf32>
    %13 = arith.mulf %12, %12 : vector<16x128xf32>
    %cst_9 = arith.constant 9.99999997E-7 : f32
    %14 = vector.broadcast %cst_9 : f32 to vector<16x128xf32>
    %15 = arith.addf %13, %14 : vector<16x128xf32>
    %16 = math.sqrt %15 : vector<16x128xf32>
    %17 = vector.shape_cast %16 : vector<16x128xf32> to vector<2x8x128xf32>
    %cst_10 = arith.constant dense<0.000000e+00> : vector<8x128xf32>
    %18 = vector.multi_reduction <add>, %17, %cst_10 [0] : vector<2x8x128xf32> to vector<8x128xf32>
    %19 = arith.addf %3, %18 : vector<8x128xf32>
    %c0_11 = arith.constant 0 : index
    %c0_12 = arith.constant 0 : index
    %20 = vector.load %arg5[%c0_11, %c0_12] : memref<16x128xf32, #tpu.memory_space<vmem>>, vector<16x128xf32>
    %c0_13 = arith.constant 0 : index
    %c0_14 = arith.constant 0 : index
    %21 = vector.load %arg6[%c0_13, %c0_14] : memref<16x128xf32, #tpu.memory_space<vmem>>, vector<16x128xf32>
    %22 = arith.subf %20, %21 : vector<16x128xf32>
    %23 = math.absf %22 : vector<16x128xf32>
    %24 = arith.mulf %7, %23 : vector<16x128xf32>
    %25 = arith.mulf %24, %24 : vector<16x128xf32>
    %cst_15 = arith.constant 9.99999997E-7 : f32
    %26 = vector.broadcast %cst_15 : f32 to vector<16x128xf32>
    %27 = arith.addf %25, %26 : vector<16x128xf32>
    %28 = math.sqrt %27 : vector<16x128xf32>
    %29 = vector.shape_cast %28 : vector<16x128xf32> to vector<2x8x128xf32>
    %cst_16 = arith.constant dense<0.000000e+00> : vector<8x128xf32>
    %30 = vector.multi_reduction <add>, %29, %cst_16 [0] : vector<2x8x128xf32> to vector<8x128xf32>
    %31 = arith.addf %4, %30 : vector<8x128xf32>
    %c0_17 = arith.constant 0 : index
    %c0_18 = arith.constant 0 : index
    %32 = vector.load %arg7[%c0_17, %c0_18] : memref<16x128xf32, #tpu.memory_space<vmem>>, vector<16x128xf32>
    %c0_19 = arith.constant 0 : index
    %c0_20 = arith.constant 0 : index
    %33 = vector.load %arg8[%c0_19, %c0_20] : memref<16x128xf32, #tpu.memory_space<vmem>>, vector<16x128xf32>
    %34 = arith.subf %32, %33 : vector<16x128xf32>
    %35 = math.absf %34 : vector<16x128xf32>
    %36 = arith.mulf %7, %35 : vector<16x128xf32>
    %37 = arith.mulf %36, %36 : vector<16x128xf32>
    %cst_21 = arith.constant 9.99999997E-7 : f32
    %38 = vector.broadcast %cst_21 : f32 to vector<16x128xf32>
    %39 = arith.addf %37, %38 : vector<16x128xf32>
    %40 = math.sqrt %39 : vector<16x128xf32>
    %41 = vector.shape_cast %40 : vector<16x128xf32> to vector<2x8x128xf32>
    %cst_22 = arith.constant dense<0.000000e+00> : vector<8x128xf32>
    %42 = vector.multi_reduction <add>, %41, %cst_22 [0] : vector<2x8x128xf32> to vector<8x128xf32>
    %43 = arith.addf %5, %42 : vector<8x128xf32>
    %44 = vector.shape_cast %7 : vector<16x128xf32> to vector<2x8x128xf32>
    %cst_23 = arith.constant dense<0.000000e+00> : vector<8x128xf32>
    %45 = vector.multi_reduction <add>, %44, %cst_23 [0] : vector<2x8x128xf32> to vector<8x128xf32>
    %46 = arith.addf %6, %45 : vector<8x128xf32>
    %c0_24 = arith.constant 0 : index
    %c0_25 = arith.constant 0 : index
    %c0_26 = arith.constant 0 : index
    %47 = vector.load %arg9[%c0_24, %c0_25, %c0_26] : memref<1x8x128xf32, #tpu.memory_space<vmem>>, vector<1x8x128xf32>
    %48 = vector.shape_cast %47 : vector<1x8x128xf32> to vector<8x128xf32>
    %49 = arith.addf %48, %19 : vector<8x128xf32>
    %c0_27 = arith.constant 0 : index
    %c0_28 = arith.constant 0 : index
    %c0_29 = arith.constant 0 : index
    %50 = vector.load %arg9[%c0_27, %c0_28, %c0_29] : memref<1x8x128xf32, #tpu.memory_space<vmem>>, vector<1x8x128xf32>
    %51 = vector.shape_cast %50 : vector<1x8x128xf32> to vector<8x128xf32>
    %52 = vector.shape_cast %49 : vector<8x128xf32> to vector<1x8x128xf32>
    tpu.vector_store %arg9[%c0_27, %c0_28, %c0_29], %52 {strides = array<i32>} : memref<1x8x128xf32, #tpu.memory_space<vmem>>, vector<1x8x128xf32>,
    %c0_30 = arith.constant 0 : index
    %c0_31 = arith.constant 0 : index
    %c0_32 = arith.constant 0 : index
    %53 = vector.load %arg10[%c0_30, %c0_31, %c0_32] : memref<1x8x128xf32, #tpu.memory_space<vmem>>, vector<1x8x128xf32>
    %54 = vector.shape_cast %53 : vector<1x8x128xf32> to vector<8x128xf32>
    %55 = arith.addf %54, %31 : vector<8x128xf32>
    %c0_33 = arith.constant 0 : index
    %c0_34 = arith.constant 0 : index
    %c0_35 = arith.constant 0 : index
    %56 = vector.load %arg10[%c0_33, %c0_34, %c0_35] : memref<1x8x128xf32, #tpu.memory_space<vmem>>, vector<1x8x128xf32>
    %57 = vector.shape_cast %56 : vector<1x8x128xf32> to vector<8x128xf32>
    %58 = vector.shape_cast %55 : vector<8x128xf32> to vector<1x8x128xf32>
    tpu.vector_store %arg10[%c0_33, %c0_34, %c0_35], %58 {strides = array<i32>} : memref<1x8x128xf32, #tpu.memory_space<vmem>>, vector<1x8x128xf32>,
    %c0_36 = arith.constant 0 : index
    %c0_37 = arith.constant 0 : index
    %c0_38 = arith.constant 0 : index
    %59 = vector.load %arg11[%c0_36, %c0_37, %c0_38] : memref<1x8x128xf32, #tpu.memory_space<vmem>>, vector<1x8x128xf32>
    %60 = vector.shape_cast %59 : vector<1x8x128xf32> to vector<8x128xf32>
    %61 = arith.addf %60, %43 : vector<8x128xf32>
    %c0_39 = arith.constant 0 : index
    %c0_40 = arith.constant 0 : index
    %c0_41 = arith.constant 0 : index
    %62 = vector.load %arg11[%c0_39, %c0_40, %c0_41] : memref<1x8x128xf32, #tpu.memory_space<vmem>>, vector<1x8x128xf32>
    %63 = vector.shape_cast %62 : vector<1x8x128xf32> to vector<8x128xf32>
    %64 = vector.shape_cast %61 : vector<8x128xf32> to vector<1x8x128xf32>
    tpu.vector_store %arg11[%c0_39, %c0_40, %c0_41], %64 {strides = array<i32>} : memref<1x8x128xf32, #tpu.memory_space<vmem>>, vector<1x8x128xf32>,
    %c0_42 = arith.constant 0 : index
    %c0_43 = arith.constant 0 : index
    %c0_44 = arith.constant 0 : index
    %65 = vector.load %arg12[%c0_42, %c0_43, %c0_44] : memref<1x8x128xf32, #tpu.memory_space<vmem>>, vector<1x8x128xf32>
    %66 = vector.shape_cast %65 : vector<1x8x128xf32> to vector<8x128xf32>
    %67 = arith.addf %66, %46 : vector<8x128xf32>
    %c0_45 = arith.constant 0 : index
    %c0_46 = arith.constant 0 : index
    %c0_47 = arith.constant 0 : index
    %68 = vector.load %arg12[%c0_45, %c0_46, %c0_47] : memref<1x8x128xf32, #tpu.memory_space<vmem>>, vector<1x8x128xf32>
    %69 = vector.shape_cast %68 : vector<1x8x128xf32> to vector<8x128xf32>
    %70 = vector.shape_cast %67 : vector<8x128xf32> to vector<1x8x128xf32>
    tpu.vector_store %arg12[%c0_45, %c0_46, %c0_47], %70 {strides = array<i32>} : memref<1x8x128xf32, #tpu.memory_space<vmem>>, vector<1x8x128xf32>,
    return
  }
  func.func @transform_0(%arg0: i32, %arg1: i32) -> (i32, i32) {
    %c1_i32 = arith.constant 1 : i32
    %0 = arith.muli %arg0, %c1_i32 : i32
    %1 = arith.addi %0, %arg1 : i32
    %c0_i32 = arith.constant 0 : i32
    %2 = arith.minsi %1, %c0_i32 : i32
    %c0_i32_0 = arith.constant 0 : i32
    %c0_i32_1 = arith.constant 0 : i32
    return %2, %c0_i32_0 : i32, i32
  }
  func.func @transform_1(%arg0: i32, %arg1: i32) -> (i32, i32) {
    %c1_i32 = arith.constant 1 : i32
    %0 = arith.muli %arg0, %c1_i32 : i32
    %1 = arith.addi %0, %arg1 : i32
    %c0_i32 = arith.constant 0 : i32
    %2 = arith.minsi %1, %c0_i32 : i32
    %c0_i32_0 = arith.constant 0 : i32
    %c0_i32_1 = arith.constant 0 : i32
    return %2, %c0_i32_0 : i32, i32
  }
  func.func @transform_2(%arg0: i32, %arg1: i32) -> (i32, i32) {
    %c1_i32 = arith.constant 1 : i32
    %0 = arith.muli %arg0, %c1_i32 : i32
    %1 = arith.addi %0, %arg1 : i32
    %c0_i32 = arith.constant 0 : i32
    %2 = arith.minsi %1, %c0_i32 : i32
    %c0_i32_0 = arith.constant 0 : i32
    %c0_i32_1 = arith.constant 0 : i32
    return %2, %c0_i32_0 : i32, i32
  }
  func.func @transform_3(%arg0: i32, %arg1: i32) -> (i32, i32) {
    %c1_i32 = arith.constant 1 : i32
    %0 = arith.muli %arg0, %c1_i32 : i32
    %1 = arith.addi %0, %arg1 : i32
    %c0_i32 = arith.constant 0 : i32
    %2 = arith.minsi %1, %c0_i32 : i32
    %c0_i32_0 = arith.constant 0 : i32
    %c0_i32_1 = arith.constant 0 : i32
    return %2, %c0_i32_0 : i32, i32
  }
  func.func @transform_4(%arg0: i32, %arg1: i32) -> (i32, i32) {
    %c1_i32 = arith.constant 1 : i32
    %0 = arith.muli %arg0, %c1_i32 : i32
    %1 = arith.addi %0, %arg1 : i32
    %c0_i32 = arith.constant 0 : i32
    %2 = arith.minsi %1, %c0_i32 : i32
    %c0_i32_0 = arith.constant 0 : i32
    %c0_i32_1 = arith.constant 0 : i32
    return %2, %c0_i32_0 : i32, i32
  }
  func.func @transform_5(%arg0: i32, %arg1: i32) -> (i32, i32) {
    %c1_i32 = arith.constant 1 : i32
    %0 = arith.muli %arg0, %c1_i32 : i32
    %1 = arith.addi %0, %arg1 : i32
    %c0_i32 = arith.constant 0 : i32
    %2 = arith.minsi %1, %c0_i32 : i32
    %c0_i32_0 = arith.constant 0 : i32
    %c0_i32_1 = arith.constant 0 : i32
    return %2, %c0_i32_0 : i32, i32
  }
  func.func @transform_6(%arg0: i32, %arg1: i32) -> (i32, i32) {
    %c1_i32 = arith.constant 1 : i32
    %0 = arith.muli %arg0, %c1_i32 : i32
    %1 = arith.addi %0, %arg1 : i32
    %c0_i32 = arith.constant 0 : i32
    %2 = arith.minsi %1, %c0_i32 : i32
    %c0_i32_0 = arith.constant 0 : i32
    %c0_i32_1 = arith.constant 0 : i32
    return %2, %c0_i32_0 : i32, i32
  }
  func.func @transform_7(%arg0: i32, %arg1: i32) -> (i32, i32, i32) {
    %c0_i32 = arith.constant 0 : i32
    %c0_i32_0 = arith.constant 0 : i32
    %c0_i32_1 = arith.constant 0 : i32
    return %arg0, %c0_i32, %c0_i32_0 : i32, i32, i32
  }
  func.func @transform_8(%arg0: i32, %arg1: i32) -> (i32, i32, i32) {
    %c0_i32 = arith.constant 0 : i32
    %c0_i32_0 = arith.constant 0 : i32
    %c0_i32_1 = arith.constant 0 : i32
    return %arg0, %c0_i32, %c0_i32_0 : i32, i32, i32
  }
  func.func @transform_9(%arg0: i32, %arg1: i32) -> (i32, i32, i32) {
    %c0_i32 = arith.constant 0 : i32
    %c0_i32_0 = arith.constant 0 : i32
    %c0_i32_1 = arith.constant 0 : i32
    return %arg0, %c0_i32, %c0_i32_0 : i32, i32, i32
  }
  func.func @transform_10(%arg0: i32, %arg1: i32) -> (i32, i32, i32) {
    %c0_i32 = arith.constant 0 : i32
    %c0_i32_0 = arith.constant 0 : i32
    %c0_i32_1 = arith.constant 0 : i32
    return %arg0, %c0_i32, %c0_i32_0 : i32, i32, i32
  }
}

</mosaic_0001>

<llo_original>
// kernel: _dp_loss_impl.1
$region0: #{_dp_loss_impl.1}
  #allocation0 [shape = 'u32[]', space=smem, size = 0x4, offset = 0x4, fixed_abs, tag = 'smem constant byte address 0x4 - core index']
  #allocation1 [shape = 'u32[144,128]{1,0:T(1,128)}', space=vmem, size = 0x12000, scoped, tag = 'internal scratch']
  %s0 = inlined_call_operand.vmem [shape: f32[16,128], index: 0, kind: input, shape index: {}]
  %s1 = inlined_call_operand.vmem [shape: f32[16,128], index: 1, kind: input, shape index: {}]
  %s2 = inlined_call_operand.vmem [shape: f32[16,128], index: 2, kind: input, shape index: {}]
  %s3 = inlined_call_operand.vmem [shape: f32[16,128], index: 3, kind: input, shape index: {}]
  %s4 = inlined_call_operand.vmem [shape: f32[16,128], index: 4, kind: input, shape index: {}]
  %s5 = inlined_call_operand.vmem [shape: f32[16,128], index: 5, kind: input, shape index: {}]
  %s6 = inlined_call_operand.vmem [shape: f32[16,128], index: 6, kind: input, shape index: {}]
  %s7 = inlined_call_operand.vmem [shape: f32[1,8,128], index: 7, kind: output, shape index: {0}]
  %s8 = inlined_call_operand.vmem [shape: f32[1,8,128], index: 8, kind: output, shape index: {1}]
  %s9 = inlined_call_operand.vmem [shape: f32[1,8,128], index: 9, kind: output, shape index: {2}]
  %s10 = inlined_call_operand.vmem [shape: f32[1,8,128], index: 10, kind: output, shape index: {3}]
  %11 = xla_tuple %s7, %s8, %s9, %s10
  %s12 = sld [smem:[#allocation0]]
  $region66: #{_dp_loss_impl.1} parent=0
    _
  %s14 = ssub.s32 1, %s12
  %s15 = scalar_select 0, %s14, %s12
  // Predicated region
  $region2: #{_dp_loss_impl.1} parent=0 // pred_check
    _
  $region3: #{_dp_loss_impl.1} parent=0 // pred_check_branch
    %17 = sbr.rel (0) target = $region5
  $region4: #{_dp_loss_impl.1} parent=0 // pred_region
    %s18 = sadd.s32 0, 0
    %p19 = scmp.lt.s32.totalorder %s18, 0
    %s20 = scalar_select %p19, %s18, 0
    %s21 = smul.u32 2, %s20
    %p22 = scmp.lt.s32.totalorder %s21, 1
    %s23 = scalar_select %p22, %s21, 1
    %s24 = smul.addr %s23, 8
    %s25 = scalar_lea.vmem %s0, %s24
    %s26 = sadd.s32 0, 0
    %p27 = scmp.lt.s32.totalorder %s26, 0
    %s28 = scalar_select %p27, %s26, 0
    %s29 = smul.u32 2, %s28
  $region5: #{_dp_loss_impl.1} parent=0 // pred_fallthru
    _
  // Predicated region
  $region6: #{_dp_loss_impl.1} parent=0 // pred_check
    _
  $region7: #{_dp_loss_impl.1} parent=0 // pred_check_branch
    %31 = sbr.rel (0) target = $region9
  $region8: #{_dp_loss_impl.1} parent=0 // pred_region
    %s32 = sadd.s32 0, 0
    %p33 = scmp.lt.s32.totalorder %s32, 0
    %s34 = scalar_select %p33, %s32, 0
    %s35 = smul.u32 2, %s34
    %p36 = scmp.lt.s32.totalorder %s35, 1
    %s37 = scalar_select %p36, %s35, 1
    %s38 = smul.addr %s37, 8
    %s39 = scalar_lea.vmem %s1, %s38
    %s40 = sadd.s32 0, 0
    %p41 = scmp.lt.s32.totalorder %s40, 0
    %s42 = scalar_select %p41, %s40, 0
    %s43 = smul.u32 2, %s42
  $region9: #{_dp_loss_impl.1} parent=0 // pred_fallthru
    _
  // Predicated region
  $region10: #{_dp_loss_impl.1} parent=0 // pred_check
    _
  $region11: #{_dp_loss_impl.1} parent=0 // pred_check_branch
    %45 = sbr.rel (0) target = $region13
  $region12: #{_dp_loss_impl.1} parent=0 // pred_region
    %s46 = sadd.s32 0, 0
    %p47 = scmp.lt.s32.totalorder %s46, 0
    %s48 = scalar_select %p47, %s46, 0
    %s49 = smul.u32 2, %s48
    %p50 = scmp.lt.s32.totalorder %s49, 1
    %s51 = scalar_select %p50, %s49, 1
    %s52 = smul.addr %s51, 8
    %s53 = scalar_lea.vmem %s2, %s52
    %s54 = sadd.s32 0, 0
    %p55 = scmp.lt.s32.totalorder %s54, 0
    %s56 = scalar_select %p55, %s54, 0
    %s57 = smul.u32 2, %s56
  $region13: #{_dp_loss_impl.1} parent=0 // pred_fallthru
    _
  // Predicated region
  $region14: #{_dp_loss_impl.1} parent=0 // pred_check
    _
  $region15: #{_dp_loss_impl.1} parent=0 // pred_check_branch
    %59 = sbr.rel (0) target = $region17
  $region16: #{_dp_loss_impl.1} parent=0 // pred_region
    %s60 = sadd.s32 0, 0
    %p61 = scmp.lt.s32.totalorder %s60, 0
    %s62 = scalar_select %p61, %s60, 0
    %s63 = smul.u32 2, %s62
    %p64 = scmp.lt.s32.totalorder %s63, 1
    %s65 = scalar_select %p64, %s63, 1
    %s66 = smul.addr %s65, 8
    %s67 = scalar_lea.vmem %s3, %s66
    %s68 = sadd.s32 0, 0
    %p69 = scmp.lt.s32.totalorder %s68, 0
    %s70 = scalar_select %p69, %s68, 0
    %s71 = smul.u32 2, %s70
  $region17: #{_dp_loss_impl.1} parent=0 // pred_fallthru
    _
  // Predicated region
  $region18: #{_dp_loss_impl.1} parent=0 // pred_check
    _
  $region19: #{_dp_loss_impl.1} parent=0 // pred_check_branch
    %73 = sbr.rel (0) target = $region21
  $region20: #{_dp_loss_impl.1} parent=0 // pred_region
    %s74 = sadd.s32 0, 0
    %p75 = scmp.lt.s32.totalorder %s74, 0
    %s76 = scalar_select %p75, %s74, 0
    %s77 = smul.u32 2, %s76
    %p78 = scmp.lt.s32.totalorder %s77, 1
    %s79 = scalar_select %p78, %s77, 1
    %s80 = smul.addr %s79, 8
    %s81 = scalar_lea.vmem %s4, %s80
    %s82 = sadd.s32 0, 0
    %p83 = scmp.lt.s32.totalorder %s82, 0
    %s84 = scalar_select %p83, %s82, 0
    %s85 = smul.u32 2, %s84
  $region21: #{_dp_loss_impl.1} parent=0 // pred_fallthru
    _
  // Predicated region
  $region22: #{_dp_loss_impl.1} parent=0 // pred_check
    _
  $region23: #{_dp_loss_impl.1} parent=0 // pred_check_branch
    %87 = sbr.rel (0) target = $region25
  $region24: #{_dp_loss_impl.1} parent=0 // pred_region
    %s88 = sadd.s32 0, 0
    %p89 = scmp.lt.s32.totalorder %s88, 0
    %s90 = scalar_select %p89, %s88, 0
    %s91 = smul.u32 2, %s90
    %p92 = scmp.lt.s32.totalorder %s91, 1
    %s93 = scalar_select %p92, %s91, 1
    %s94 = smul.addr %s93, 8
    %s95 = scalar_lea.vmem %s5, %s94
    %s96 = sadd.s32 0, 0
    %p97 = scmp.lt.s32.totalorder %s96, 0
    %s98 = scalar_select %p97, %s96, 0
    %s99 = smul.u32 2, %s98
  $region25: #{_dp_loss_impl.1} parent=0 // pred_fallthru
    _
  // Predicated region
  $region26: #{_dp_loss_impl.1} parent=0 // pred_check
    _
  $region27: #{_dp_loss_impl.1} parent=0 // pred_check_branch
    %101 = sbr.rel (0) target = $region29
  $region28: #{_dp_loss_impl.1} parent=0 // pred_region
    %s102 = sadd.s32 0, 0
    %p103 = scmp.lt.s32.totalorder %s102, 0
    %s104 = scalar_select %p103, %s102, 0
    %s105 = smul.u32 2, %s104
    %p106 = scmp.lt.s32.totalorder %s105, 1
    %s107 = scalar_select %p106, %s105, 1
    %s108 = smul.addr %s107, 8
    %s109 = scalar_lea.vmem %s6, %s108
    %s110 = sadd.s32 0, 0
    %p111 = scmp.lt.s32.totalorder %s110, 0
    %s112 = scalar_select %p111, %s110, 0
    %s113 = smul.u32 2, %s112
  $region29: #{_dp_loss_impl.1} parent=0 // pred_fallthru
    _
  %s114 = sadd.s32 0, 0
  %p115 = scmp.lt.s32.totalorder %s114, 0
  %s116 = scalar_select %p115, %s114, 0
  %s117 = smul.u32 2, %s116
  %p118 = scmp.lt.s32.totalorder %s117, 1
  %s119 = scalar_select %p118, %s117, 1
  %s120 = smul.addr %s119, 8
  %s121 = scalar_lea.vmem %s0, %s120
  %s122 = sadd.s32 0, 0
  %p123 = scmp.lt.s32.totalorder %s122, 0
  %s124 = scalar_select %p123, %s122, 0
  %s125 = smul.u32 2, %s124
  %p126 = scmp.lt.s32.totalorder %s125, 1
  %s127 = scalar_select %p126, %s125, 1
  %s128 = smul.addr %s127, 8
  %s129 = scalar_lea.vmem %s1, %s128
  %s130 = sadd.s32 0, 0
  %p131 = scmp.lt.s32.totalorder %s130, 0
  %s132 = scalar_select %p131, %s130, 0
  %s133 = smul.u32 2, %s132
  %p134 = scmp.lt.s32.totalorder %s133, 1
  %s135 = scalar_select %p134, %s133, 1
  %s136 = smul.addr %s135, 8
  %s137 = scalar_lea.vmem %s2, %s136
  %s138 = sadd.s32 0, 0
  %p139 = scmp.lt.s32.totalorder %s138, 0
  %s140 = scalar_select %p139, %s138, 0
  %s141 = smul.u32 2, %s140
  %p142 = scmp.lt.s32.totalorder %s141, 1
  %s143 = scalar_select %p142, %s141, 1
  %s144 = smul.addr %s143, 8
  %s145 = scalar_lea.vmem %s3, %s144
  %s146 = sadd.s32 0, 0
  %p147 = scmp.lt.s32.totalorder %s146, 0
  %s148 = scalar_select %p147, %s146, 0
  %s149 = smul.u32 2, %s148
  %p150 = scmp.lt.s32.totalorder %s149, 1
  %s151 = scalar_select %p150, %s149, 1
  %s152 = smul.addr %s151, 8
  %s153 = scalar_lea.vmem %s4, %s152
  %s154 = sadd.s32 0, 0
  %p155 = scmp.lt.s32.totalorder %s154, 0
  %s156 = scalar_select %p155, %s154, 0
  %s157 = smul.u32 2, %s156
  %p158 = scmp.lt.s32.totalorder %s157, 1
  %s159 = scalar_select %p158, %s157, 1
  %s160 = smul.addr %s159, 8
  %s161 = scalar_lea.vmem %s5, %s160
  %s162 = sadd.s32 0, 0
  %p163 = scmp.lt.s32.totalorder %s162, 0
  %s164 = scalar_select %p163, %s162, 0
  %s165 = smul.u32 2, %s164
  %p166 = scmp.lt.s32.totalorder %s165, 1
  %s167 = scalar_select %p166, %s165, 1
  %s168 = smul.addr %s167, 8
  %s169 = scalar_lea.vmem %s6, %s168
  %s170 = sadd.s32 0, 0
  %p171 = scmp.lt.s32.totalorder %s170, 0
  %s172 = scalar_select %p171, %s170, 0
  %s173 = smul.u32 2, %s172
  %p174 = scmp.lt.s32.totalorder %s173, 1
  %s175 = scalar_select %p174, %s173, 1
  %s176 = smul.addr %s175, 8
  %s177 = scalar_lea.vmem %s0, %s176
  %s178 = sadd.s32 0, 0
  %p179 = scmp.lt.s32.totalorder %s178, 0
  %s180 = scalar_select %p179, %s178, 0
  %s181 = smul.u32 2, %s180
  %s182 = sadd.s32 0, 0
  %p183 = scmp.lt.s32.totalorder %s182, 0
  %s184 = scalar_select %p183, %s182, 0
  %s185 = smul.u32 2, %s184
  %p186 = scmp.lt.s32.totalorder %s185, 1
  %s187 = scalar_select %p186, %s185, 1
  %s188 = smul.addr %s187, 8
  %s189 = scalar_lea.vmem %s1, %s188
  %s190 = sadd.s32 0, 0
  %p191 = scmp.lt.s32.totalorder %s190, 0
  %s192 = scalar_select %p191, %s190, 0
  %s193 = smul.u32 2, %s192
  %s194 = sadd.s32 0, 0
  %p195 = scmp.lt.s32.totalorder %s194, 0
  %s196 = scalar_select %p195, %s194, 0
  %s197 = smul.u32 2, %s196
  %p198 = scmp.lt.s32.totalorder %s197, 1
  %s199 = scalar_select %p198, %s197, 1
  %s200 = smul.addr %s199, 8
  %s201 = scalar_lea.vmem %s2, %s200
  %s202 = sadd.s32 0, 0
  %p203 = scmp.lt.s32.totalorder %s202, 0
  %s204 = scalar_select %p203, %s202, 0
  %s205 = smul.u32 2, %s204
  %s206 = sadd.s32 0, 0
  %p207 = scmp.lt.s32.totalorder %s206, 0
  %s208 = scalar_select %p207, %s206, 0
  %s209 = smul.u32 2, %s208
  %p210 = scmp.lt.s32.totalorder %s209, 1
  %s211 = scalar_select %p210, %s209, 1
  %s212 = smul.addr %s211, 8
  %s213 = scalar_lea.vmem %s3, %s212
  %s214 = sadd.s32 0, 0
  %p215 = scmp.lt.s32.totalorder %s214, 0
  %s216 = scalar_select %p215, %s214, 0
  %s217 = smul.u32 2, %s216
  %s218 = sadd.s32 0, 0
  %p219 = scmp.lt.s32.totalorder %s218, 0
  %s220 = scalar_select %p219, %s218, 0
  %s221 = smul.u32 2, %s220
  %p222 = scmp.lt.s32.totalorder %s221, 1
  %s223 = scalar_select %p222, %s221, 1
  %s224 = smul.addr %s223, 8
  %s225 = scalar_lea.vmem %s4, %s224
  %s226 = sadd.s32 0, 0
  %p227 = scmp.lt.s32.totalorder %s226, 0
  %s228 = scalar_select %p227, %s226, 0
  %s229 = smul.u32 2, %s228
  %s230 = sadd.s32 0, 0
  %p231 = scmp.lt.s32.totalorder %s230, 0
  %s232 = scalar_select %p231, %s230, 0
  %s233 = smul.u32 2, %s232
  %p234 = scmp.lt.s32.totalorder %s233, 1
  %s235 = scalar_select %p234, %s233, 1
  %s236 = smul.addr %s235, 8
  %s237 = scalar_lea.vmem %s5, %s236
  %s238 = sadd.s32 0, 0
  %p239 = scmp.lt.s32.totalorder %s238, 0
  %s240 = scalar_select %p239, %s238, 0
  %s241 = smul.u32 2, %s240
  %s242 = sadd.s32 0, 0
  %p243 = scmp.lt.s32.totalorder %s242, 0
  %s244 = scalar_select %p243, %s242, 0
  %s245 = smul.u32 2, %s244
  %p246 = scmp.lt.s32.totalorder %s245, 1
  %s247 = scalar_select %p246, %s245, 1
  %s248 = smul.addr %s247, 8
  %s249 = scalar_lea.vmem %s6, %s248
  %s250 = sadd.s32 0, 0
  %p251 = scmp.lt.s32.totalorder %s250, 0
  %s252 = scalar_select %p251, %s250, 0
  %s253 = smul.u32 2, %s252
  %p254 = scmp.eq.s32.totalorder 0, 0
  // Predicated region
  $region30: #{_dp_loss_impl.1} parent=0 // pred_check
    %p255 = pneg %p254
  $region31: #{_dp_loss_impl.1} parent=0 // pred_check_branch
    %257 = sbr.rel (%p255) target = $region33
  $region32: #{_dp_loss_impl.1} parent=0 // pred_region
    %258 = vst [vmem:[%s7] sm:$0xff] 0.0
    %259 = vst [vmem:[%s8] sm:$0xff] 0.0
    %260 = vst [vmem:[%s9] sm:$0xff] 0.0
    %261 = vst [vmem:[%s10] sm:$0xff] 0.0
  $region33: #{_dp_loss_impl.1} parent=0 // pred_fallthru
    _
  %v262 = vld [vmem:[%s177] sm:$0xff]
  %v263 = vld [vmem:[%s177 + $0x8] sm:$0xff]
  %v264 = vld [vmem:[%s189] sm:$0xff]
  %v265 = vld [vmem:[%s189 + $0x8] sm:$0xff]
  %v266 = vld [vmem:[%s201] sm:$0xff]
  %v267 = vld [vmem:[%s201 + $0x8] sm:$0xff]
  %v268 = vsub.f32 %v264, %v266
  %v269 = vsub.f32 %v265, %v267
  %v270 = vand.u32 2147483647, %v268
  %v271 = vand.u32 2147483647, %v269
  %v272 = vmul.f32 %v262, %v270
  %v273 = vmul.f32 %v263, %v271
  %v274 = vmul.f32 %v272, %v272
  %v275 = vmul.f32 %v273, %v273
  %v276 = vadd.f32 %v274, 1e-06
  %v277 = vadd.f32 %v275, 1e-06
  %v278 = vrsqrt.pop %v276
  %v279 = vmul.f32 %v276, %v278
  %vm280 = vcmp.eq.f32.partialorder %v276, inf
  %v281 = vsel %vm280, %v276, %v279
  %vm282 = vcmp.eq.f32.partialorder %v276, 0.0
  %v283 = vand.u32 %v276, 2147483648
  %v284 = vsel %vm282, %v283, %v281
  %v285 = vrsqrt.pop %v277
  %v286 = vmul.f32 %v277, %v285
  %vm287 = vcmp.eq.f32.partialorder %v277, inf
  %v288 = vsel %vm287, %v277, %v286
  %vm289 = vcmp.eq.f32.partialorder %v277, 0.0
  %v290 = vand.u32 %v277, 2147483648
  %v291 = vsel %vm289, %v290, %v288
  %v292 = vadd.f32 %v284, %v291
  %v293 = vadd.f32 %v292, 0.0
  %v294 = vld [vmem:[%s213] sm:$0xff]
  %v295 = vld [vmem:[%s213 + $0x8] sm:$0xff]
  %v296 = vld [vmem:[%s225] sm:$0xff]
  %v297 = vld [vmem:[%s225 + $0x8] sm:$0xff]
  %v298 = vsub.f32 %v294, %v296
  %v299 = vsub.f32 %v295, %v297
  %v300 = vand.u32 2147483647, %v298
  %v301 = vand.u32 2147483647, %v299
  %v302 = vmul.f32 %v262, %v300
  %v303 = vmul.f32 %v263, %v301
  %v304 = vmul.f32 %v302, %v302
  %v305 = vmul.f32 %v303, %v303
  %v306 = vadd.f32 %v304, 1e-06
  %v307 = vadd.f32 %v305, 1e-06
  %v308 = vrsqrt.pop %v306
  %v309 = vmul.f32 %v306, %v308
  %vm310 = vcmp.eq.f32.partialorder %v306, inf
  %v311 = vsel %vm310, %v306, %v309
  %vm312 = vcmp.eq.f32.partialorder %v306, 0.0
  %v313 = vand.u32 %v306, 2147483648
  %v314 = vsel %vm312, %v313, %v311
  %v315 = vrsqrt.pop %v307
  %v316 = vmul.f32 %v307, %v315
  %vm317 = vcmp.eq.f32.partialorder %v307, inf
  %v318 = vsel %vm317, %v307, %v316
  %vm319 = vcmp.eq.f32.partialorder %v307, 0.0
  %v320 = vand.u32 %v307, 2147483648
  %v321 = vsel %vm319, %v320, %v318
  %v322 = vadd.f32 %v314, %v321
  %v323 = vadd.f32 %v322, 0.0
  %v324 = vld [vmem:[%s237] sm:$0xff]
  %v325 = vld [vmem:[%s237 + $0x8] sm:$0xff]
  %v326 = vld [vmem:[%s249] sm:$0xff]
  %v327 = vld [vmem:[%s249 + $0x8] sm:$0xff]
  %v328 = vsub.f32 %v324, %v326
  %v329 = vsub.f32 %v325, %v327
  %v330 = vand.u32 2147483647, %v328
  %v331 = vand.u32 2147483647, %v329
  %v332 = vmul.f32 %v262, %v330
  %v333 = vmul.f32 %v263, %v331
  %v334 = vmul.f32 %v332, %v332
  %v335 = vmul.f32 %v333, %v333
  %v336 = vadd.f32 %v334, 1e-06
  %v337 = vadd.f32 %v335, 1e-06
  %v338 = vrsqrt.pop %v336
  %v339 = vmul.f32 %v336, %v338
  %vm340 = vcmp.eq.f32.partialorder %v336, inf
  %v341 = vsel %vm340, %v336, %v339
  %vm342 = vcmp.eq.f32.partialorder %v336, 0.0
  %v343 = vand.u32 %v336, 2147483648
  %v344 = vsel %vm342, %v343, %v341
  %v345 = vrsqrt.pop %v337
  %v346 = vmul.f32 %v337, %v345
  %vm347 = vcmp.eq.f32.partialorder %v337, inf
  %v348 = vsel %vm347, %v337, %v346
  %vm349 = vcmp.eq.f32.partialorder %v337, 0.0
  %v350 = vand.u32 %v337, 2147483648
  %v351 = vsel %vm349, %v350, %v348
  %v352 = vadd.f32 %v344, %v351
  %v353 = vadd.f32 %v352, 0.0
  %v354 = vadd.f32 %v262, %v263
  %v355 = vadd.f32 %v354, 0.0
  %v356 = vld [vmem:[%s7] sm:$0xff]
  %v357 = vadd.f32 %v356, %v293
  %358 = vst [vmem:[%s7] sm:$0xff] %v357
  %v359 = vld [vmem:[%s8] sm:$0xff]
  %v360 = vadd.f32 %v359, %v323
  %361 = vst [vmem:[%s8] sm:$0xff] %v360
  %v362 = vld [vmem:[%s9] sm:$0xff]
  %v363 = vadd.f32 %v362, %v353
  %364 = vst [vmem:[%s9] sm:$0xff] %v363
  %v365 = vld [vmem:[%s10] sm:$0xff]
  %v366 = vadd.f32 %v365, %v355
  %367 = vst [vmem:[%s10] sm:$0xff] %v366
  // Predicated region
  $region34: #{_dp_loss_impl.1} parent=0 // pred_check
    _
  $region35: #{_dp_loss_impl.1} parent=0 // pred_check_branch
    %369 = sbr.rel (0) target = $region37
  $region36: #{_dp_loss_impl.1} parent=0 // pred_region
    _
  $region37: #{_dp_loss_impl.1} parent=0 // pred_fallthru
    _
  // Predicated region
  $region38: #{_dp_loss_impl.1} parent=0 // pred_check
    _
  $region39: #{_dp_loss_impl.1} parent=0 // pred_check_branch
    %371 = sbr.rel (0) target = $region41
  $region40: #{_dp_loss_impl.1} parent=0 // pred_region
    _
  $region41: #{_dp_loss_impl.1} parent=0 // pred_fallthru
    _
  // Predicated region
  $region42: #{_dp_loss_impl.1} parent=0 // pred_check
    _
  $region43: #{_dp_loss_impl.1} parent=0 // pred_check_branch
    %373 = sbr.rel (0) target = $region45
  $region44: #{_dp_loss_impl.1} parent=0 // pred_region
    _
  $region45: #{_dp_loss_impl.1} parent=0 // pred_fallthru
    _
  // Predicated region
  $region46: #{_dp_loss_impl.1} parent=0 // pred_check
    _
  $region47: #{_dp_loss_impl.1} parent=0 // pred_check_branch
    %375 = sbr.rel (0) target = $region49
  $region48: #{_dp_loss_impl.1} parent=0 // pred_region
    _
  $region49: #{_dp_loss_impl.1} parent=0 // pred_fallthru
    _
  // Predicated region
  $region50: #{_dp_loss_impl.1} parent=0 // pred_check
    _
  $region51: #{_dp_loss_impl.1} parent=0 // pred_check_branch
    %377 = sbr.rel (0) target = $region53
  $region52: #{_dp_loss_impl.1} parent=0 // pred_region
    _
  $region53: #{_dp_loss_impl.1} parent=0 // pred_fallthru
    _
  // Predicated region
  $region54: #{_dp_loss_impl.1} parent=0 // pred_check
    _
  $region55: #{_dp_loss_impl.1} parent=0 // pred_check_branch
    %379 = sbr.rel (0) target = $region57
  $region56: #{_dp_loss_impl.1} parent=0 // pred_region
    _
  $region57: #{_dp_loss_impl.1} parent=0 // pred_fallthru
    _
  // Predicated region
  $region58: #{_dp_loss_impl.1} parent=0 // pred_check
    _
  $region59: #{_dp_loss_impl.1} parent=0 // pred_check_branch
    %381 = sbr.rel (0) target = $region61
  $region60: #{_dp_loss_impl.1} parent=0 // pred_region
    _
  $region61: #{_dp_loss_impl.1} parent=0 // pred_fallthru
    _
  // Predicated region
  $region62: #{_dp_loss_impl.1} parent=0 // pred_check
    _
  $region63: #{_dp_loss_impl.1} parent=0 // pred_check_branch
    %383 = sbr.rel (0) target = $region65
  $region64: #{_dp_loss_impl.1} parent=0 // pred_region
    _
  $region65: #{_dp_loss_impl.1} parent=0 // pred_fallthru
    _

</llo_original>
